<compile_context>
chip_gen: v7x
topology: tpu7x:2x2x1
jax: 0.10.0
libtpu: 0.0.40
codegen_flags: <defaults>
</compile_context>

<pallas_src>
import numpy as np
import jax
import jax.numpy as jnp
from jax.experimental import pallas as pl
from jax.experimental.pallas import tpu as pltpu


# ----------------------------- Pallas kernels --------------------------------
def _project_tile(x, w1, b1, w2, b2, out_dtype):
    """Per-pixel MLP + ReLU + 1x1 conv + L2 normalize on a (C, TP) tile.

    x/w1/w2 may be bf16; accumulation is f32.  `h` is kept in f32 (only one
    rounding step vs the PyTorch f32 reference)."""
    h = jnp.dot(w1, x, preferred_element_type=jnp.float32) + b1        # (C, TP) f32
    h = jnp.maximum(h, 0.0)
    o = jnp.dot(w2.astype(jnp.float32), h,
                preferred_element_type=jnp.float32) + b2               # (Cout, TP) f32
    # F.normalize(p=2, dim=channel): v / max(||v||_2, 1e-12)  (rsqrt -> EUP slot)
    nrm2 = jnp.sum(o * o, axis=0, keepdims=True)                       # sublane reduce
    return (o * jax.lax.rsqrt(jnp.maximum(nrm2, 1e-24))).astype(out_dtype)


def _memory_proj_kernel(x_ref, w1_ref, b1_ref, w2_ref, b2_ref, o_ref):
    """Tiled path: one (1, C, TP) pixel tile of one batch element per step."""
    o_ref[0] = _project_tile(x_ref[0], w1_ref[...], b1_ref[...],
                             w2_ref[...], b2_ref[...], o_ref.dtype)


def _memory_proj_kernel_small(x_ref, w1_ref, b1_ref, w2_ref, b2_ref, o_ref):
    """Single-step path for tiny configs: whole (B, C, P) resident in VMEM."""
    w1, b1, w2, b2 = w1_ref[...], b1_ref[...], w2_ref[...], b2_ref[...]
    for b in range(x_ref.shape[0]):     # static unroll; small-path guard keeps B tiny
        o_ref[b] = _project_tile(x_ref[b], w1, b1, w2, b2, o_ref.dtype)


# ------------------------------ tiling policy ---------------------------------
_SMALL_X_BYTES = 256 * 1024     # below this, one grid step is strictly cheaper
_MAX_UNROLL_BATCH = 8


def _choose_tile_p(P, *, C, Cout, in_itemsize, out_itemsize, batch,
                   max_tp=2048, vmem_budget_bytes=24 * 1024 * 1024):
    """Pixel-tile size for the tiled path.

    Whole P when small; otherwise a multiple of 128 (lane-dense blocks), capped
    at max_tp and by a VMEM budget that is safe on v7x (64 MiB physical,
    32 MiB scoped default): 3 buffered X tiles + 2 buffered output tiles."""
    if P <= 128:
        return P
    per_px_bytes = 3 * C * in_itemsize + 2 * Cout * out_itemsize
    tp = min(max_tp, vmem_budget_bytes // max(per_px_bytes, 1))
    tp = max(128, (tp // 128) * 128)
    if batch == 1 and P >= 256:
        # Guarantee >= 2 pixel tiles so the 2nd v7x TensorCore has work.
        tp = min(tp, max(128, (P // 2 // 128) * 128))
    if tp >= P:
        return P
    return tp


def memory_proj_pallas(x, w1, b1, w2, b2, *, compute_dtype=jnp.bfloat16,
                       out_dtype=jnp.float32):
    """x: (B, C, P) -> (B, Cout, P).  Weights in PyTorch conv layout:
    w1: (C, C), b1: (C,), w2: (Cout, C), b2: (Cout,)."""
    B, C, P = x.shape
    Cout = w2.shape[0]

    # bf16 input/weights halve the dominant HBM stream; biases + accumulation
    # stay f32 (exact bias add, exact reductions).
    x = x.astype(compute_dtype)
    w1 = w1.astype(compute_dtype)
    w2 = w2.astype(compute_dtype)
    b1 = b1.reshape(C, 1).astype(jnp.float32)
    b2 = b2.reshape(Cout, 1).astype(jnp.float32)

    in_itemsize = jnp.dtype(compute_dtype).itemsize
    out_itemsize = jnp.dtype(out_dtype).itemsize
    x_bytes = B * C * P * in_itemsize

    # Let XLA fuse the producer of x (the summed level tensor) into the input
    # stream of the pallas_call; weights/biases stay unfused.
    allow_fusion = [True, False, False, False, False]

    # ---- tiny-config path: one grid step, one DMA each way ----
    if x_bytes <= _SMALL_X_BYTES and B <= _MAX_UNROLL_BATCH:
        return pl.pallas_call(
            _memory_proj_kernel_small,
            out_shape=jax.ShapeDtypeStruct((B, Cout, P), out_dtype),
            grid=(1,),
            in_specs=[
                pl.BlockSpec((B, C, P), lambda i: (0, 0, 0)),
                pl.BlockSpec((C, C), lambda i: (0, 0)),
                pl.BlockSpec((C, 1), lambda i: (0, 0)),
                pl.BlockSpec((Cout, C), lambda i: (0, 0)),
                pl.BlockSpec((Cout, 1), lambda i: (0, 0)),
            ],
            out_specs=pl.BlockSpec((B, Cout, P), lambda i: (0, 0, 0)),
            compiler_params=pltpu.CompilerParams(
                dimension_semantics=("arbitrary",),
                allow_input_fusion=allow_fusion,
                vmem_limit_bytes=32 * 1024 * 1024,
            ),
        )(x, w1, b1, w2, b2)

    # ---- production path: grid over (batch, pixel tiles) ----
    tp = _choose_tile_p(P, C=C, Cout=Cout, in_itemsize=in_itemsize,
                        out_itemsize=out_itemsize, batch=B)
    num_p = pl.cdiv(P, tp)

    # Deeper buffering on the one streaming input only (hides input DMA behind
    # the short per-tile compute); pointless for <4 total steps.
    x_spec_kwargs = {}
    if B * num_p >= 4:
        x_spec_kwargs = dict(pipeline_mode=pl.Buffered(3))

    return pl.pallas_call(
        _memory_proj_kernel,
        out_shape=jax.ShapeDtypeStruct((B, Cout, P), out_dtype),
        grid=(B, num_p),
        in_specs=[
            pl.BlockSpec((1, C, tp), lambda b, p: (b, 0, p), **x_spec_kwargs),
            pl.BlockSpec((C, C), lambda b, p: (0, 0)),       # w1 (resident)
            pl.BlockSpec((C, 1), lambda b, p: (0, 0)),       # b1
            pl.BlockSpec((Cout, C), lambda b, p: (0, 0)),    # w2
            pl.BlockSpec((Cout, 1), lambda b, p: (0, 0)),    # b2
        ],
        out_specs=pl.BlockSpec((1, Cout, tp), lambda b, p: (b, 0, p)),
        compiler_params=pltpu.CompilerParams(
            dimension_semantics=("parallel", "parallel"),   # megacore on v7x
            allow_input_fusion=allow_fusion,
            # Explicit scoped-VMEM budget, safe on all of v5e/v6e/v7x (v7x has
            # only 64 MiB physical — do not raise this past ~48 MiB there).
            vmem_limit_bytes=32 * 1024 * 1024,
        ),
    )(x, w1, b1, w2, b2)


# ------------------------------- JAX glue ------------------------------------
def _bilinear_matrix(n_out, n_in):
    """1-D interpolation matrix matching F.interpolate(mode='bilinear',
    align_corners=False)."""
    A = np.zeros((n_out, n_in), dtype=np.float32)
    scale = n_in / n_out
    for i in range(n_out):
        src = max((i + 0.5) * scale - 0.5, 0.0)
        i0 = min(int(np.floor(src)), n_in - 1)
        i1 = min(i0 + 1, n_in - 1)
        frac = src - i0
        A[i, i0] += 1.0 - frac
        A[i, i1] += frac
    return A


def memory_proj_forward(memory, memory_pos, memory_mask, hw_lvl, params, *,
                        compute_dtype=jnp.bfloat16, out_dtype=jnp.float32):
    """Mirrors _MemoryProj.forward (norm='l2'). memory_mask is unused there."""
    del memory_mask
    bsz, nMem, C = memory.shape
    hw_lvl = [tuple(int(v) for v in hw) for hw in hw_lvl[:3]]
    n_used = sum(h * w for h, w in hw_lvl)
    # Real inputs may carry more levels than the 3 used -> slice, not assert-equal.
    assert nMem >= n_used, (memory.shape, hw_lvl)
    H0, W0 = hw_lvl[0]

    mwp = (memory + memory_pos)[:, :n_used, :]       # .detach() is a no-op in fwd

    begin = 0
    summed = None
    for (h, w) in hw_lvl:
        m2d = mwp[:, begin:begin + h * w, :].reshape(bsz, h, w, C)
        begin += h * w
        if (h, w) == (H0, W0):
            # scale==1 with align_corners=False is the identity resample ->
            # skip the two dense matmuls for the dominant level.
            up = jnp.transpose(m2d, (0, 3, 1, 2))                     # (B, C, H0, W0)
        else:
            Ah = jnp.asarray(_bilinear_matrix(H0, h))
            Aw = jnp.asarray(_bilinear_matrix(W0, w))
            # exact bilinear upsample expressed as two small matmuls (glue)
            up = jnp.einsum("ip,bpqc,jq->bcij", Ah, m2d, Aw)
        summed = up if summed is None else summed + up

    x = summed.reshape(bsz, C, H0 * W0)                               # channels-first
    out = memory_proj_pallas(x, params["w1"], params["b1"],
                             params["w2"], params["b2"],
                             compute_dtype=compute_dtype, out_dtype=out_dtype)
    return out.reshape(bsz, -1, H0, W0)                               # NCHW, no transpose


def _reference_forward(memory, memory_pos, hw_lvl, params):
    """Pure-JAX f32 reference of the PyTorch forward (for the sanity check)."""
    bsz, _, C = memory.shape
    hw = [tuple(int(v) for v in t) for t in hw_lvl[:3]]
    H0, W0 = hw[0]
    mwp = memory + memory_pos
    begin, acc = 0, 0.0
    for (h, w) in hw:
        m2d = mwp[:, begin:begin + h * w, :].reshape(bsz, h, w, C)
        begin += h * w
        Ah = jnp.asarray(_bilinear_matrix(H0, h))
        Aw = jnp.asarray(_bilinear_matrix(W0, w))
        acc = acc + jnp.einsum("ip,bpqc,jq->bcij", Ah, m2d, Aw)
    h1 = jnp.maximum(jnp.einsum("oc,bchw->bohw", params["w1"], acc)
                     + params["b1"][None, :, None, None], 0.0)
    o = (jnp.einsum("oc,bchw->bohw", params["w2"], h1)
         + params["b2"][None, :, None, None])
    nrm = jnp.sqrt(jnp.sum(o * o, axis=1, keepdims=True))
    return o / jnp.maximum(nrm, 1e-12)


def init_params(key, in_channels, out_channels):
    """Deterministic synthetic init (PyTorch Conv2d-style uniform bounds).
    Weights stored in PyTorch conv layout (out, in)."""
    k1, k2, k3, k4 = jax.random.split(key, 4)
    bound = 1.0 / np.sqrt(in_channels)
    w1 = jax.random.uniform(k1, (in_channels, in_channels), jnp.float32, -bound, bound)
    b1 = jax.random.uniform(k2, (in_channels,), jnp.float32, -bound, bound)
    w2 = jax.random.uniform(k3, (out_channels, in_channels), jnp.float32, -bound, bound)
    b2 = jax.random.uniform(k4, (out_channels,), jnp.float32, -bound, bound)
    return dict(w1=w1, b1=b1, w2=w2, b2=b2)


# --------------------------------- main --------------------------------------
if __name__ == "__main__":
    fwd = jax.jit(memory_proj_forward,
                  static_argnames=("hw_lvl", "compute_dtype", "out_dtype"))
    key = jax.random.PRNGKey(0)

    # --- config 1: tiny toy shapes (single-step small path) ---
    B, C, Cout = 2, 8, 4
    hw_lvl = ((8, 8), (4, 4), (2, 2), (1, 1))         # only first 3 levels are used
    nMem = sum(h * w for h, w in hw_lvl[:3])          # 64 + 16 + 4 = 84
    k1, k2, k3, key = jax.random.split(key, 4)
    memory = jax.random.normal(k1, (B, nMem, C), jnp.float32)
    memory_pos = jax.random.normal(k2, (B, nMem, C), jnp.float32)
    memory_mask = jnp.zeros((B, nMem), jnp.bool_)      # unused by the forward pass
    params = init_params(k3, C, Cout)

    out = fwd(memory, memory_pos, memory_mask, hw_lvl=hw_lvl, params=params)
    jax.block_until_ready(out)
    assert out.shape == (B, Cout, 8, 8), out.shape

    # correctness sanity check of the f32 path against a pure-JAX reference
    out_f32 = fwd(memory, memory_pos, memory_mask, hw_lvl=hw_lvl, params=params,
                  compute_dtype=jnp.float32)
    ref = _reference_forward(memory, memory_pos, hw_lvl, params)
    assert jnp.allclose(out_f32, ref, atol=1e-5, rtol=1e-5), \
        float(jnp.max(jnp.abs(out_f32 - ref)))

    # --- config 2: larger shapes (tiled / Buffered(3) pipeline path, bf16 out) ---
    B2, C2, Cout2 = 2, 32, 16
    hw_lvl2 = ((64, 64), (32, 32), (16, 16), (8, 8))
    nMem2 = sum(h * w for h, w in hw_lvl2[:3])
    k1, k2, k3, key = jax.random.split(key, 4)
    memory2 = jax.random.normal(k1, (B2, nMem2, C2), jnp.float32)
    memory_pos2 = jax.random.normal(k2, (B2, nMem2, C2), jnp.float32)
    memory_mask2 = jnp.zeros((B2, nMem2), jnp.bool_)
    params2 = init_params(k3, C2, Cout2)

    out2 = fwd(memory2, memory_pos2, memory_mask2, hw_lvl=hw_lvl2, params=params2,
               out_dtype=jnp.bfloat16)
    jax.block_until_ready(out2)
    assert out2.shape == (B2, Cout2, 64, 64), out2.shape

    print("KERNEL_OK")
</pallas_src>

<mosaic_0001>
module attributes {stable_mosaic.version = 11 : i64} {
  func.func @_memory_proj_kernel_small(%arg0: i32, %arg1: memref<2x8x64xbf16, #tpu.memory_space<vmem>>, %arg2: memref<8x8xbf16, #tpu.memory_space<vmem>>, %arg3: memref<8x1xf32, #tpu.memory_space<vmem>>, %arg4: memref<4x8xbf16, #tpu.memory_space<vmem>>, %arg5: memref<4x1xf32, #tpu.memory_space<vmem>>, %arg6: memref<2x4x64xf32, #tpu.memory_space<vmem>>) attributes {dimension_semantics = [#tpu.dimension_semantics<arbitrary>], iteration_bounds = array<i64: 1>, scalar_prefetch = 0 : i64, scratch_operands = 0 : i64, tpu.core_type = #tpu.core_type<tc>, window_params = [{pipeline_mode = #tpu.pipeline_mode<synchronous>, transform_indices = @transform_0, window_bounds = array<i64: 2, 8, 64>}, {pipeline_mode = #tpu.pipeline_mode<synchronous>, transform_indices = @transform_1, window_bounds = array<i64: 8, 8>}, {pipeline_mode = #tpu.pipeline_mode<synchronous>, transform_indices = @transform_2, window_bounds = array<i64: 8, 1>}, {pipeline_mode = #tpu.pipeline_mode<synchronous>, transform_indices = @transform_3, window_bounds = array<i64: 4, 8>}, {pipeline_mode = #tpu.pipeline_mode<synchronous>, transform_indices = @transform_4, window_bounds = array<i64: 4, 1>}, {pipeline_mode = #tpu.pipeline_mode<synchronous>, transform_indices = @transform_5, window_bounds = array<i64: 2, 4, 64>}]} {
    %c0 = arith.constant 0 : index
    %c0_0 = arith.constant 0 : index
    %0 = vector.load %arg2[%c0, %c0_0] : memref<8x8xbf16, #tpu.memory_space<vmem>>, vector<8x8xbf16>
    %c0_1 = arith.constant 0 : index
    %c0_2 = arith.constant 0 : index
    %1 = vector.load %arg3[%c0_1, %c0_2] : memref<8x1xf32, #tpu.memory_space<vmem>>, vector<8x1xf32>
    %c0_3 = arith.constant 0 : index
    %c0_4 = arith.constant 0 : index
    %2 = vector.load %arg4[%c0_3, %c0_4] : memref<4x8xbf16, #tpu.memory_space<vmem>>, vector<4x8xbf16>
    %c0_5 = arith.constant 0 : index
    %c0_6 = arith.constant 0 : index
    %3 = vector.load %arg5[%c0_5, %c0_6] : memref<4x1xf32, #tpu.memory_space<vmem>>, vector<4x1xf32>
    %c0_7 = arith.constant 0 : index
    %c0_8 = arith.constant 0 : index
    %c0_9 = arith.constant 0 : index
    %4 = vector.load %arg1[%c0_7, %c0_8, %c0_9] : memref<2x8x64xbf16, #tpu.memory_space<vmem>>, vector<1x8x64xbf16>
    %5 = vector.shape_cast %4 : vector<1x8x64xbf16> to vector<8x64xbf16>
    %cst = arith.constant dense<0.000000e+00> : vector<8x64xf32>
    %6 = tpu.matmul %0, %5, %cst {dimension_numbers = #tpu.dot_dimension_numbers<[1], [0], [0], [1], [0, 0, 1, 1], [], []>} : vector<8x8xbf16>, vector<8x64xbf16>, vector<8x64xf32> -> vector<8x64xf32>
    %7 = vector.broadcast %1 : vector<8x1xf32> to vector<8x64xf32>
    %8 = arith.addf %6, %7 : vector<8x64xf32>
    %cst_10 = arith.constant 0.000000e+00 : f32
    %9 = vector.broadcast %cst_10 : f32 to vector<8x64xf32>
    %10 = arith.maximumf %8, %9 : vector<8x64xf32>
    %11 = arith.extf %2 : vector<4x8xbf16> to vector<4x8xf32>
    %cst_11 = arith.constant dense<0.000000e+00> : vector<4x64xf32>
    %12 = tpu.matmul %11, %10, %cst_11 {dimension_numbers = #tpu.dot_dimension_numbers<[1], [0], [0], [1], [0, 0, 1, 1], [], []>} : vector<4x8xf32>, vector<8x64xf32>, vector<4x64xf32> -> vector<4x64xf32>
    %13 = vector.broadcast %3 : vector<4x1xf32> to vector<4x64xf32>
    %14 = arith.addf %12, %13 : vector<4x64xf32>
    %15 = arith.mulf %14, %14 : vector<4x64xf32>
    %cst_12 = arith.constant dense<0.000000e+00> : vector<64xf32>
    %16 = vector.multi_reduction <add>, %15, %cst_12 [0] : vector<4x64xf32> to vector<64xf32>
    %17 = vector.shape_cast %16 : vector<64xf32> to vector<1x64xf32>
    %cst_13 = arith.constant 1.000000e-24 : f32
    %18 = vector.broadcast %cst_13 : f32 to vector<1x64xf32>
    %19 = arith.maximumf %17, %18 : vector<1x64xf32>
    %20 = math.rsqrt %19 : vector<1x64xf32>
    %21 = vector.broadcast %20 : vector<1x64xf32> to vector<4x64xf32>
    %22 = arith.mulf %14, %21 : vector<4x64xf32>
    %c0_14 = arith.constant 0 : index
    %c0_15 = arith.constant 0 : index
    %c0_16 = arith.constant 0 : index
    %23 = vector.load %arg6[%c0_14, %c0_15, %c0_16] : memref<2x4x64xf32, #tpu.memory_space<vmem>>, vector<1x4x64xf32>
    %24 = vector.shape_cast %23 : vector<1x4x64xf32> to vector<4x64xf32>
    %25 = vector.shape_cast %22 : vector<4x64xf32> to vector<1x4x64xf32>
    tpu.vector_store %arg6[%c0_14, %c0_15, %c0_16], %25 {strides = array<i32>} : memref<2x4x64xf32, #tpu.memory_space<vmem>>, vector<1x4x64xf32>,
    %c1 = arith.constant 1 : index
    %c0_17 = arith.constant 0 : index
    %c0_18 = arith.constant 0 : index
    %26 = vector.load %arg1[%c1, %c0_17, %c0_18] : memref<2x8x64xbf16, #tpu.memory_space<vmem>>, vector<1x8x64xbf16>
    %27 = vector.shape_cast %26 : vector<1x8x64xbf16> to vector<8x64xbf16>
    %cst_19 = arith.constant dense<0.000000e+00> : vector<8x64xf32>
    %28 = tpu.matmul %0, %27, %cst_19 {dimension_numbers = #tpu.dot_dimension_numbers<[1], [0], [0], [1], [0, 0, 1, 1], [], []>} : vector<8x8xbf16>, vector<8x64xbf16>, vector<8x64xf32> -> vector<8x64xf32>
    %29 = vector.broadcast %1 : vector<8x1xf32> to vector<8x64xf32>
    %30 = arith.addf %28, %29 : vector<8x64xf32>
    %cst_20 = arith.constant 0.000000e+00 : f32
    %31 = vector.broadcast %cst_20 : f32 to vector<8x64xf32>
    %32 = arith.maximumf %30, %31 : vector<8x64xf32>
    %33 = arith.extf %2 : vector<4x8xbf16> to vector<4x8xf32>
    %cst_21 = arith.constant dense<0.000000e+00> : vector<4x64xf32>
    %34 = tpu.matmul %33, %32, %cst_21 {dimension_numbers = #tpu.dot_dimension_numbers<[1], [0], [0], [1], [0, 0, 1, 1], [], []>} : vector<4x8xf32>, vector<8x64xf32>, vector<4x64xf32> -> vector<4x64xf32>
    %35 = vector.broadcast %3 : vector<4x1xf32> to vector<4x64xf32>
    %36 = arith.addf %34, %35 : vector<4x64xf32>
    %37 = arith.mulf %36, %36 : vector<4x64xf32>
    %cst_22 = arith.constant dense<0.000000e+00> : vector<64xf32>
    %38 = vector.multi_reduction <add>, %37, %cst_22 [0] : vector<4x64xf32> to vector<64xf32>
    %39 = vector.shape_cast %38 : vector<64xf32> to vector<1x64xf32>
    %cst_23 = arith.constant 1.000000e-24 : f32
    %40 = vector.broadcast %cst_23 : f32 to vector<1x64xf32>
    %41 = arith.maximumf %39, %40 : vector<1x64xf32>
    %42 = math.rsqrt %41 : vector<1x64xf32>
    %43 = vector.broadcast %42 : vector<1x64xf32> to vector<4x64xf32>
    %44 = arith.mulf %36, %43 : vector<4x64xf32>
    %c1_24 = arith.constant 1 : index
    %c0_25 = arith.constant 0 : index
    %c0_26 = arith.constant 0 : index
    %45 = vector.load %arg6[%c1_24, %c0_25, %c0_26] : memref<2x4x64xf32, #tpu.memory_space<vmem>>, vector<1x4x64xf32>
    %46 = vector.shape_cast %45 : vector<1x4x64xf32> to vector<4x64xf32>
    %47 = vector.shape_cast %44 : vector<4x64xf32> to vector<1x4x64xf32>
    tpu.vector_store %arg6[%c1_24, %c0_25, %c0_26], %47 {strides = array<i32>} : memref<2x4x64xf32, #tpu.memory_space<vmem>>, vector<1x4x64xf32>,
    return
  }
  func.func @transform_0(%arg0: i32) -> (i32, i32, i32) {
    %c0_i32 = arith.constant 0 : i32
    %c0_i32_0 = arith.constant 0 : i32
    %c0_i32_1 = arith.constant 0 : i32
    %c0_i32_2 = arith.constant 0 : i32
    return %c0_i32, %c0_i32_0, %c0_i32_1 : i32, i32, i32
  }
  func.func @transform_1(%arg0: i32) -> (i32, i32) {
    %c0_i32 = arith.constant 0 : i32
    %c0_i32_0 = arith.constant 0 : i32
    %c0_i32_1 = arith.constant 0 : i32
    return %c0_i32, %c0_i32_0 : i32, i32
  }
  func.func @transform_2(%arg0: i32) -> (i32, i32) {
    %c0_i32 = arith.constant 0 : i32
    %c0_i32_0 = arith.constant 0 : i32
    %c0_i32_1 = arith.constant 0 : i32
    return %c0_i32, %c0_i32_0 : i32, i32
  }
  func.func @transform_3(%arg0: i32) -> (i32, i32) {
    %c0_i32 = arith.constant 0 : i32
    %c0_i32_0 = arith.constant 0 : i32
    %c0_i32_1 = arith.constant 0 : i32
    return %c0_i32, %c0_i32_0 : i32, i32
  }
  func.func @transform_4(%arg0: i32) -> (i32, i32) {
    %c0_i32 = arith.constant 0 : i32
    %c0_i32_0 = arith.constant 0 : i32
    %c0_i32_1 = arith.constant 0 : i32
    return %c0_i32, %c0_i32_0 : i32, i32
  }
  func.func @transform_5(%arg0: i32) -> (i32, i32, i32) {
    %c0_i32 = arith.constant 0 : i32
    %c0_i32_0 = arith.constant 0 : i32
    %c0_i32_1 = arith.constant 0 : i32
    %c0_i32_2 = arith.constant 0 : i32
    return %c0_i32, %c0_i32_0, %c0_i32_1 : i32, i32, i32
  }
}

</mosaic_0001>

<llo_original>
// kernel: memory_proj_forward.1
$region0: #{memory_proj_forward.1}
  #allocation0 [shape = 'u32[]', space=smem, size = 0x4, offset = 0x4, fixed_abs, tag = 'smem constant byte address 0x4 - core index']
  #allocation1 [shape = 'u32[144,128]{1,0:T(1,128)}', space=vmem, size = 0x12000, scoped, tag = 'internal scratch']
  %s0 = inlined_call_operand.vmem [shape: bf16[2,8,64], index: 0, kind: input, shape index: {}]
  %s1 = inlined_call_operand.vmem [shape: bf16[8,8], index: 1, kind: input, shape index: {}]
  %s2 = inlined_call_operand.vmem [shape: f32[8,1], index: 2, kind: input, shape index: {}]
  %s3 = inlined_call_operand.vmem [shape: bf16[4,8], index: 3, kind: input, shape index: {}]
  %s4 = inlined_call_operand.vmem [shape: f32[4,1], index: 4, kind: input, shape index: {}]
  %s5 = inlined_call_operand.vmem [shape: f32[2,4,64], index: 5, kind: output, shape index: {}]
  %s6 = sld [smem:[#allocation0]]
  $region30: #{memory_proj_forward.1} parent=0
    _
  %s8 = ssub.s32 1, %s6
  %s9 = scalar_select 0, %s8, %s6
  // Predicated region
  $region2: #{memory_proj_forward.1} parent=0 // pred_check
    _
  $region3: #{memory_proj_forward.1} parent=0 // pred_check_branch
    %11 = sbr.rel (0) target = $region5
  $region4: #{memory_proj_forward.1} parent=0 // pred_region
    _
  $region5: #{memory_proj_forward.1} parent=0 // pred_fallthru
    _
  // Predicated region
  $region6: #{memory_proj_forward.1} parent=0 // pred_check
    _
  $region7: #{memory_proj_forward.1} parent=0 // pred_check_branch
    %13 = sbr.rel (0) target = $region9
  $region8: #{memory_proj_forward.1} parent=0 // pred_region
    _
  $region9: #{memory_proj_forward.1} parent=0 // pred_fallthru
    _
  // Predicated region
  $region10: #{memory_proj_forward.1} parent=0 // pred_check
    _
  $region11: #{memory_proj_forward.1} parent=0 // pred_check_branch
    %15 = sbr.rel (0) target = $region13
  $region12: #{memory_proj_forward.1} parent=0 // pred_region
    _
  $region13: #{memory_proj_forward.1} parent=0 // pred_fallthru
    _
  // Predicated region
  $region14: #{memory_proj_forward.1} parent=0 // pred_check
    _
  $region15: #{memory_proj_forward.1} parent=0 // pred_check_branch
    %17 = sbr.rel (0) target = $region17
  $region16: #{memory_proj_forward.1} parent=0 // pred_region
    _
  $region17: #{memory_proj_forward.1} parent=0 // pred_fallthru
    _
  // Predicated region
  $region18: #{memory_proj_forward.1} parent=0 // pred_check
    _
  $region19: #{memory_proj_forward.1} parent=0 // pred_check_branch
    %19 = sbr.rel (0) target = $region21
  $region20: #{memory_proj_forward.1} parent=0 // pred_region
    _
  $region21: #{memory_proj_forward.1} parent=0 // pred_fallthru
    _
  %v21 = vld [vmem:[%s1] sm:$0xf]
  %v22 = vld [vmem:[%s2] sm:$0xff]
  %v23 = vld [vmem:[%s3] sm:$0x3]
  %v24 = vld [vmem:[%s4] sm:$0xf]
  %v25 = vld [vmem:[%s0] sm:$0xf]
  %27 = vset.pattern.permute.xlu0 0
  %28 = vperm.xlu0 %27, %v22
  %v29 = vpop.permute.xlu0 %28
  %vm31 = vcmask 64512
  %v33 = vsel %vm31, %v21, 0
  %vm35 = vcmask 1043456
  %v37 = vsel %vm35, %v25, 0
  %39 = vmatprep.subr.bf16.mxu0 0
  %40 = vmatpush1.bf16.msra.mxu0 %v37
  %41 = vmatprep.subr.bf16.mxu0 0
  %42 = vmatpush1.bf16.msra.mxu0 0
  %43 = vmatprep.subr.bf16.mxu0 0
  %44 = vmatpush1.bf16.msra.mxu0 0
  %45 = vmatprep.subr.bf16.mxu0 0
  %46 = vmatpush1.bf16.msra.mxu0 0
  %47 = vmatprep.subr.bf16.mxu0 0
  %48 = vmatpush1.bf16.msra.mxu0 0
  %49 = vmatprep.subr.bf16.mxu0 0
  %50 = vmatpush1.bf16.msra.mxu0 0
  %51 = vmatprep.subr.bf16.mxu0 0
  %52 = vmatpush1.bf16.msra.mxu0 0
  %53 = vmatprep.subr.bf16.mxu0 0
  %54 = vmatpush1.bf16.msra.mxu0 0
  %55 = vmatprep.subr.bf16.mxu0 0
  %56 = vmatpush1.bf16.msra.mxu0 0
  %57 = vmatprep.subr.bf16.mxu0 0
  %58 = vmatpush1.bf16.msra.mxu0 0
  %59 = vmatprep.subr.bf16.mxu0 0
  %60 = vmatpush1.bf16.msra.mxu0 0
  %61 = vmatprep.subr.bf16.mxu0 0
  %62 = vmatpush1.bf16.msra.mxu0 0
  %63 = vmatprep.subr.bf16.mxu0 0
  %64 = vmatpush1.bf16.msra.mxu0 0
  %65 = vmatprep.subr.bf16.mxu0 0
  %66 = vmatpush1.bf16.msra.mxu0 0
  %67 = vmatprep.subr.bf16.mxu0 0
  %68 = vmatpush1.bf16.msra.mxu0 0
  %69 = vmatprep.subr.bf16.mxu0 0
  %70 = vmatpush1.bf16.msra.mxu0 0
  %71 = vmatprep.mubr.bf16.mxu0 0
  %72 = vmatmul.mubr.bf16.gmra.mrb[0].mxu0 %v33
  %v73 = vpop.f32.mrb[0].mxu0
  %v74 = vadd.f32 %v29, %v73
  %v75 = vpop.f32.mrb[0].mxu0
  %v76 = vpop.f32.mrb[0].mxu0
  %v77 = vpop.f32.mrb[0].mxu0
  %78 = vdwg.mxu0
  %v79 = vmax.f32 %v74, 0.0
  %v80 = vunpack.c.l.bf16 %v23
  %82 = vset.pattern.permute.xlu0 0
  %83 = vperm.xlu0 %82, %v24
  %v84 = vpop.permute.xlu0 %83
  %v87 = vsel %vm31, %v80, 0
  %89 = vmatprep.subr.mxu0 0.0
  %90 = vmatpush1.msra.mxu0 %v79
  %91 = vmatprep.subr.mxu0 0.0
  %92 = vmatpush1.msra.mxu0 0.0
  %93 = vmatprep.subr.mxu0 0.0
  %94 = vmatpush1.msra.mxu0 0.0
  %95 = vmatprep.subr.mxu0 0.0
  %96 = vmatpush1.msra.mxu0 0.0
  %97 = vmatprep.subr.mxu0 0.0
  %98 = vmatpush1.msra.mxu0 0.0
  %99 = vmatprep.subr.mxu0 0.0
  %100 = vmatpush1.msra.mxu0 0.0
  %101 = vmatprep.subr.mxu0 0.0
  %102 = vmatpush1.msra.mxu0 0.0
  %103 = vmatprep.subr.mxu0 0.0
  %104 = vmatpush1.msra.mxu0 0.0
  %105 = vmatprep.subr.mxu0 0.0
  %106 = vmatpush1.msra.mxu0 0.0
  %107 = vmatprep.subr.mxu0 0.0
  %108 = vmatpush1.msra.mxu0 0.0
  %109 = vmatprep.subr.mxu0 0.0
  %110 = vmatpush1.msra.mxu0 0.0
  %111 = vmatprep.subr.mxu0 0.0
  %112 = vmatpush1.msra.mxu0 0.0
  %113 = vmatprep.subr.mxu0 0.0
  %114 = vmatpush1.msra.mxu0 0.0
  %115 = vmatprep.subr.mxu0 0.0
  %116 = vmatpush1.msra.mxu0 0.0
  %117 = vmatprep.subr.mxu0 0.0
  %118 = vmatpush1.msra.mxu0 0.0
  %119 = vmatprep.subr.mxu0 0.0
  %120 = vmatpush1.msra.mxu0 0.0
  %121 = vmatprep.subr.mxu0 0.0
  %122 = vmatpush1.msra.mxu0 0.0
  %123 = vmatprep.subr.mxu0 0.0
  %124 = vmatpush1.msra.mxu0 0.0
  %125 = vmatprep.subr.mxu0 0.0
  %126 = vmatpush1.msra.mxu0 0.0
  %127 = vmatprep.subr.mxu0 0.0
  %128 = vmatpush1.msra.mxu0 0.0
  %129 = vmatprep.subr.mxu0 0.0
  %130 = vmatpush1.msra.mxu0 0.0
  %131 = vmatprep.subr.mxu0 0.0
  %132 = vmatpush1.msra.mxu0 0.0
  %133 = vmatprep.subr.mxu0 0.0
  %134 = vmatpush1.msra.mxu0 0.0
  %135 = vmatprep.subr.mxu0 0.0
  %136 = vmatpush1.msra.mxu0 0.0
  %137 = vmatprep.subr.mxu0 0.0
  %138 = vmatpush1.msra.mxu0 0.0
  %139 = vmatprep.subr.mxu0 0.0
  %140 = vmatpush1.msra.mxu0 0.0
  %141 = vmatprep.subr.mxu0 0.0
  %142 = vmatpush1.msra.mxu0 0.0
  %143 = vmatprep.subr.mxu0 0.0
  %144 = vmatpush1.msra.mxu0 0.0
  %145 = vmatprep.subr.mxu0 0.0
  %146 = vmatpush1.msra.mxu0 0.0
  %147 = vmatprep.subr.mxu0 0.0
  %148 = vmatpush1.msra.mxu0 0.0
  %149 = vmatprep.subr.mxu0 0.0
  %150 = vmatpush1.msra.mxu0 0.0
  %151 = vmatprep.subr.mxu0 0.0
  %152 = vmatpush1.msra.mxu0 0.0
  %153 = vmatprep.mubr.f32.mxu0 0.0
  %154 = vmatmul.mubr.f32.gmra.mrb[0].mxu0 %v87
  %v155 = vpop.f32.mrb[0].mxu0
  %v156 = vadd.f32 %v84, %v155
  %v157 = vpop.f32.mrb[0].mxu0
  %158 = vdwg.mxu0
  %v159 = vmul.f32 %v156, %v156
  %vm160 = vcmask 519168
  %v161 = vsel %vm160, %v159, 0.0
  %v162 = vrot.slane %v161, 4
  %v163 = vadd.f32 %v161, %v162
  %v164 = vrot.slane %v163, 2
  %v165 = vadd.f32 %v163, %v164
  %v166 = vrot.slane %v165, 1
  %v167 = vadd.f32 %v165, %v166
  %v168 = vmax.f32 %v167, 1e-24
  %v169 = vrsqrt.pop %v168
  %v170 = vmul.f32 %v156, %v169
  %171 = vst.msk [vmem:[%s5] sm:$0xf] %vm160, %v170
  %s172 = scalar_lea.vmem %s0, 4
  %v173 = vld [vmem:[%s172] sm:$0xf]
  %v175 = vsel %vm35, %v173, 0
  %177 = vmatprep.subr.bf16.mxu0 0
  %178 = vmatpush1.bf16.msra.mxu0 %v175
  %179 = vmatprep.subr.bf16.mxu0 0
  %180 = vmatpush1.bf16.msra.mxu0 0
  %181 = vmatprep.subr.bf16.mxu0 0
  %182 = vmatpush1.bf16.msra.mxu0 0
  %183 = vmatprep.subr.bf16.mxu0 0
  %184 = vmatpush1.bf16.msra.mxu0 0
  %185 = vmatprep.subr.bf16.mxu0 0
  %186 = vmatpush1.bf16.msra.mxu0 0
  %187 = vmatprep.subr.bf16.mxu0 0
  %188 = vmatpush1.bf16.msra.mxu0 0
  %189 = vmatprep.subr.bf16.mxu0 0
  %190 = vmatpush1.bf16.msra.mxu0 0
  %191 = vmatprep.subr.bf16.mxu0 0
  %192 = vmatpush1.bf16.msra.mxu0 0
  %193 = vmatprep.subr.bf16.mxu0 0
  %194 = vmatpush1.bf16.msra.mxu0 0
  %195 = vmatprep.subr.bf16.mxu0 0
  %196 = vmatpush1.bf16.msra.mxu0 0
  %197 = vmatprep.subr.bf16.mxu0 0
  %198 = vmatpush1.bf16.msra.mxu0 0
  %199 = vmatprep.subr.bf16.mxu0 0
  %200 = vmatpush1.bf16.msra.mxu0 0
  %201 = vmatprep.subr.bf16.mxu0 0
  %202 = vmatpush1.bf16.msra.mxu0 0
  %203 = vmatprep.subr.bf16.mxu0 0
  %204 = vmatpush1.bf16.msra.mxu0 0
  %205 = vmatprep.subr.bf16.mxu0 0
  %206 = vmatpush1.bf16.msra.mxu0 0
  %207 = vmatprep.subr.bf16.mxu0 0
  %208 = vmatpush1.bf16.msra.mxu0 0
  %209 = vmatprep.mubr.bf16.mxu0 0
  %210 = vmatmul.mubr.bf16.gmra.mrb[0].mxu0 %v33
  %v211 = vpop.f32.mrb[0].mxu0
  %v212 = vadd.f32 %v29, %v211
  %v213 = vpop.f32.mrb[0].mxu0
  %v214 = vpop.f32.mrb[0].mxu0
  %v215 = vpop.f32.mrb[0].mxu0
  %216 = vdwg.mxu0
  %v217 = vmax.f32 %v212, 0.0
  %218 = vmatprep.subr.mxu0 0.0
  %219 = vmatpush1.msra.mxu0 %v217
  %220 = vmatprep.subr.mxu0 0.0
  %221 = vmatpush1.msra.mxu0 0.0
  %222 = vmatprep.subr.mxu0 0.0
  %223 = vmatpush1.msra.mxu0 0.0
  %224 = vmatprep.subr.mxu0 0.0
  %225 = vmatpush1.msra.mxu0 0.0
  %226 = vmatprep.subr.mxu0 0.0
  %227 = vmatpush1.msra.mxu0 0.0
  %228 = vmatprep.subr.mxu0 0.0
  %229 = vmatpush1.msra.mxu0 0.0
  %230 = vmatprep.subr.mxu0 0.0
  %231 = vmatpush1.msra.mxu0 0.0
  %232 = vmatprep.subr.mxu0 0.0
  %233 = vmatpush1.msra.mxu0 0.0
  %234 = vmatprep.subr.mxu0 0.0
  %235 = vmatpush1.msra.mxu0 0.0
  %236 = vmatprep.subr.mxu0 0.0
  %237 = vmatpush1.msra.mxu0 0.0
  %238 = vmatprep.subr.mxu0 0.0
  %239 = vmatpush1.msra.mxu0 0.0
  %240 = vmatprep.subr.mxu0 0.0
  %241 = vmatpush1.msra.mxu0 0.0
  %242 = vmatprep.subr.mxu0 0.0
  %243 = vmatpush1.msra.mxu0 0.0
  %244 = vmatprep.subr.mxu0 0.0
  %245 = vmatpush1.msra.mxu0 0.0
  %246 = vmatprep.subr.mxu0 0.0
  %247 = vmatpush1.msra.mxu0 0.0
  %248 = vmatprep.subr.mxu0 0.0
  %249 = vmatpush1.msra.mxu0 0.0
  %250 = vmatprep.subr.mxu0 0.0
  %251 = vmatpush1.msra.mxu0 0.0
  %252 = vmatprep.subr.mxu0 0.0
  %253 = vmatpush1.msra.mxu0 0.0
  %254 = vmatprep.subr.mxu0 0.0
  %255 = vmatpush1.msra.mxu0 0.0
  %256 = vmatprep.subr.mxu0 0.0
  %257 = vmatpush1.msra.mxu0 0.0
  %258 = vmatprep.subr.mxu0 0.0
  %259 = vmatpush1.msra.mxu0 0.0
  %260 = vmatprep.subr.mxu0 0.0
  %261 = vmatpush1.msra.mxu0 0.0
  %262 = vmatprep.subr.mxu0 0.0
  %263 = vmatpush1.msra.mxu0 0.0
  %264 = vmatprep.subr.mxu0 0.0
  %265 = vmatpush1.msra.mxu0 0.0
  %266 = vmatprep.subr.mxu0 0.0
  %267 = vmatpush1.msra.mxu0 0.0
  %268 = vmatprep.subr.mxu0 0.0
  %269 = vmatpush1.msra.mxu0 0.0
  %270 = vmatprep.subr.mxu0 0.0
  %271 = vmatpush1.msra.mxu0 0.0
  %272 = vmatprep.subr.mxu0 0.0
  %273 = vmatpush1.msra.mxu0 0.0
  %274 = vmatprep.subr.mxu0 0.0
  %275 = vmatpush1.msra.mxu0 0.0
  %276 = vmatprep.subr.mxu0 0.0
  %277 = vmatpush1.msra.mxu0 0.0
  %278 = vmatprep.subr.mxu0 0.0
  %279 = vmatpush1.msra.mxu0 0.0
  %280 = vmatprep.subr.mxu0 0.0
  %281 = vmatpush1.msra.mxu0 0.0
  %282 = vmatprep.mubr.f32.mxu0 0.0
  %283 = vmatmul.mubr.f32.gmra.mrb[0].mxu0 %v87
  %v284 = vpop.f32.mrb[0].mxu0
  %v285 = vadd.f32 %v84, %v284
  %v286 = vpop.f32.mrb[0].mxu0
  %287 = vdwg.mxu0
  %v288 = vmul.f32 %v285, %v285
  %v289 = vsel %vm160, %v288, 0.0
  %v290 = vrot.slane %v289, 4
  %v291 = vadd.f32 %v289, %v290
  %v292 = vrot.slane %v291, 2
  %v293 = vadd.f32 %v291, %v292
  %v294 = vrot.slane %v293, 1
  %v295 = vadd.f32 %v293, %v294
  %v296 = vmax.f32 %v295, 1e-24
  %v297 = vrsqrt.pop %v296
  %v298 = vmul.f32 %v285, %v297
  %s299 = scalar_lea.vmem %s5, 4
  %300 = vst.msk [vmem:[%s299] sm:$0xf] %vm160, %v298
  // Predicated region
  $region22: #{memory_proj_forward.1} parent=0 // pred_check
    _
  $region23: #{memory_proj_forward.1} parent=0 // pred_check_branch
    %302 = sbr.rel (0) target = $region25
  $region24: #{memory_proj_forward.1} parent=0 // pred_region
    _
  $region25: #{memory_proj_forward.1} parent=0 // pred_fallthru
    _
  // Predicated region
  $region26: #{memory_proj_forward.1} parent=0 // pred_check
    _
  $region27: #{memory_proj_forward.1} parent=0 // pred_check_branch
    %304 = sbr.rel (0) target = $region29
  $region28: #{memory_proj_forward.1} parent=0 // pred_region
    _
  $region29: #{memory_proj_forward.1} parent=0 // pred_fallthru
    _

</llo_original>
